<compile_context>
chip_gen: v7x
topology: tpu7x:2x2x1
jax: 0.10.0
libtpu: 0.0.40
codegen_flags: <defaults>
</compile_context>

<pallas_src>
import math
import functools

import jax
import jax.numpy as jnp
from jax import lax
from jax.experimental import pallas as pl
from jax.experimental.pallas import tpu as pltpu


def _round_up(x, m):
    return (x + m - 1) // m * m


def _auto_vmem_limit(tb, d, tc, matmul_dtype, out_dtype):
    """Double-buffered tile footprint + headroom, capped for v7x's 64 MiB."""
    mm_b = jnp.dtype(matmul_dtype).itemsize
    out_b = jnp.dtype(out_dtype).itemsize
    per_buf = (tb * d * mm_b            # x tile
               + d * tc * mm_b          # weight tile
               + tb * tc * out_b        # output tile
               + tb * 128 * 4)          # label tile (lane-padded int32)
    need = 2 * per_buf + (4 << 20)      # double buffers + compiler headroom
    return int(min(max(need, 8 << 20), 48 << 20))


def _cosine_kernel(xn_ref, wt_ref, out_ref):
    # xn is already row-normalized, wt is already column-normalized, so the
    # MXU contraction directly yields cosines.
    out_ref[...] = jnp.dot(
        xn_ref[...], wt_ref[...],
        preferred_element_type=jnp.float32).astype(out_ref.dtype)


def _arcmargin_kernel(label_ref, xn_ref, wt_ref, out_ref, *,
                      s, cos_m, sin_m, th, mm, easy_margin, block_c):
    j = pl.program_id(0)                 # class-tile index (outer axis)

    cosine = jnp.dot(xn_ref[...], wt_ref[...],
                     preferred_element_type=jnp.float32)

    # One-hot for this class tile: global class id = j * block_c + lane iota.
    tb, tc = cosine.shape
    class_ids = lax.broadcasted_iota(jnp.int32, (tb, tc), 1) + j * block_c
    one_hot = class_ids == label_ref[...]          # (TB, TC) vs (TB, 1)

    # Margin math only on a (TB, 1) vector (target column per row). Rows whose
    # target class is not in this tile get cos_t == 0 but never select phi_t.
    cos_t = jnp.sum(jnp.where(one_hot, cosine, 0.0), axis=-1, keepdims=True)
    sin_t = jnp.sqrt(jnp.clip(1.0 - cos_t * cos_t, 0.0, 1.0))
    phi_t = cos_t * cos_m - sin_t * sin_m
    if easy_margin:
        phi_t = jnp.where(cos_t > 0.0, phi_t, cos_t)
    else:
        phi_t = jnp.where(cos_t > th, phi_t, cos_t - mm)

    out_ref[...] = (jnp.where(one_hot, phi_t, cosine) * s).astype(out_ref.dtype)


class ArcMarginProduct:
    """JAX/Pallas port of the PyTorch ArcMarginProduct (ArcFace) head."""

    def __init__(self, in_features, out_features, s=30.0, m=0.5,
                 easy_margin=False, key=None,
                 block_b=256, block_c=2048,
                 matmul_dtype=jnp.bfloat16, out_dtype=jnp.float32,
                 vmem_limit_bytes=None):
        self.in_features = int(in_features)
        self.out_features = int(out_features)
        self.s = float(s)
        self.m = float(m)
        self.easy_margin = bool(easy_margin)
        self.cos_m = math.cos(m)
        self.sin_m = math.sin(m)
        self.th = math.cos(math.pi - m)
        self.mm = math.sin(math.pi - m) * m
        self.matmul_dtype = matmul_dtype
        self.out_dtype = out_dtype
        self.block_b = int(block_b)                 # multiple of 8
        self.vmem_limit_bytes = vmem_limit_bytes    # None -> auto

        # xavier_uniform_ for weight in PyTorch layout (out_features, in_features).
        if key is None:
            key = jax.random.PRNGKey(0)
        bound = math.sqrt(6.0 / (in_features + out_features))
        self.weight = jax.random.uniform(
            key, (out_features, in_features), dtype=jnp.float32,
            minval=-bound, maxval=bound)

        # Pad classes only to a 128 multiple; pick TC as a divisor of Cp so no
        # over-padding and no post-kernel column slice when C % 128 == 0.
        cp = _round_up(self.out_features, 128)
        tc_cap = max(128, min(int(block_c), cp))
        tc_cap -= tc_cap % 128
        tc = 128
        for cand in range(tc_cap, 127, -128):
            if cp % cand == 0:
                tc = cand
                break
        self.c_padded = cp
        self.block_c = tc

        # Fold per-class 1/||w_c|| directly into the stored weight: normalize
        # rows in f32, transpose to (D, Cp), pad with exact zeros, cast once.
        w = self.weight.astype(jnp.float32)
        norm = jnp.sqrt(jnp.sum(w * w, axis=-1, keepdims=True))
        w_n = w / jnp.maximum(norm, 1e-12)          # matches F.normalize eps
        w_t = jnp.pad(w_n.T, ((0, 0), (0, cp - self.out_features)))
        self.weight_t = w_t.astype(self.matmul_dtype)   # (D, Cp), col-normalized

    def __call__(self, x, label=None):
        B, D = x.shape
        assert D == self.in_features
        C, Cp, TC = self.out_features, self.c_padded, self.block_c

        TB = min(self.block_b, _round_up(B, 8))
        Bp = _round_up(B, TB)

        # Row-normalize x once in the wrapper (B x D is tiny) in f32, cast to
        # the MXU operand dtype, pad the batch to a multiple of TB.
        xf = x.astype(jnp.float32)
        ssq = jnp.sum(xf * xf, axis=-1, keepdims=True)
        xn = (xf * lax.rsqrt(jnp.maximum(ssq, 1e-24))).astype(self.matmul_dtype)
        if Bp != B:
            xn = jnp.pad(xn, ((0, Bp - B), (0, 0)))

        grid = (Cp // TC, Bp // TB)                 # class outer, batch inner

        x_spec = pl.BlockSpec((TB, D), lambda j, i: (i, 0))
        wt_spec = pl.BlockSpec((D, TC), lambda j, i: (0, j))   # resident over i
        out_spec = pl.BlockSpec((TB, TC), lambda j, i: (i, j))

        vmem_limit = self.vmem_limit_bytes
        if vmem_limit is None:
            vmem_limit = _auto_vmem_limit(TB, D, TC, self.matmul_dtype,
                                          self.out_dtype)

        cparams = pltpu.CompilerParams(
            dimension_semantics=("parallel", "parallel"),
            vmem_limit_bytes=vmem_limit)
        out_shape = jax.ShapeDtypeStruct((Bp, Cp), self.out_dtype)

        if label is None:
            out = pl.pallas_call(
                _cosine_kernel,
                out_shape=out_shape,
                grid=grid,
                in_specs=[x_spec, wt_spec],
                out_specs=out_spec,
                compiler_params=cparams,
            )(xn, self.weight_t)
        else:
            # TODO(synk): label could also go through PrefetchScalarGridSpec
            # scalar prefetch (SMEM) to gate margin work on class tiles with no
            # target class; kept as a tiny resident (TB, 1) VMEM block here.
            lab = label.reshape(-1).astype(jnp.int32)
            if Bp != B:
                lab = jnp.pad(lab, (0, Bp - B))
            lab = lab.reshape(Bp, 1)

            kernel = functools.partial(
                _arcmargin_kernel,
                s=self.s, cos_m=self.cos_m, sin_m=self.sin_m,
                th=self.th, mm=self.mm, easy_margin=self.easy_margin,
                block_c=TC)

            out = pl.pallas_call(
                kernel,
                out_shape=out_shape,
                grid=grid,
                in_specs=[pl.BlockSpec((TB, 1), lambda j, i: (i, 0)),  # label
                          x_spec, wt_spec],
                out_specs=out_spec,
                compiler_params=cparams,
            )(lab, xn, self.weight_t)

        if Bp != B:
            out = out[:B]
        if Cp != C:
            # Only when out_features is not a multiple of 128.
            out = out[:, :C]
        return out


def _reference(x, w, label, s, cos_m, sin_m, th, mm, easy_margin):
    eps = 1e-12
    x_n = x / jnp.maximum(jnp.linalg.norm(x, axis=-1, keepdims=True), eps)
    w_n = w / jnp.maximum(jnp.linalg.norm(w, axis=-1, keepdims=True), eps)
    cosine = x_n @ w_n.T
    sine = jnp.sqrt(jnp.clip(1.0 - cosine ** 2, 0.0, 1.0))
    phi = cosine * cos_m - sine * sin_m
    if easy_margin:
        phi = jnp.where(cosine > 0, phi, cosine)
    else:
        phi = jnp.where(cosine > th, phi, cosine - mm)
    one_hot = jax.nn.one_hot(label, cosine.shape[1], dtype=cosine.dtype)
    return (one_hot * phi + (1.0 - one_hot) * cosine) * s, cosine


if __name__ == "__main__":
    key = jax.random.PRNGKey(0)
    k_x, k_w, k_lbl, k_x2, k_lbl2 = jax.random.split(key, 5)

    # Shapes that exercise padding and the multi-tile grid:
    # B=24 -> TB=16, Bp=32 (2 batch tiles); C=200 -> Cp=256, TC=128 (2 class tiles).
    B, in_features, out_features = 24, 32, 200
    x = jax.random.normal(k_x, (B, in_features), dtype=jnp.float32)
    label = jax.random.randint(k_lbl, (B,), 0, out_features, dtype=jnp.int32)

    # Default (fast) head: bf16 MXU operands.
    head = ArcMarginProduct(in_features, out_features, s=30.0, m=0.5,
                            easy_margin=False, key=k_w,
                            block_b=16, block_c=128)
    out_bf16 = jax.block_until_ready(head(x, label))
    cos_bf16 = jax.block_until_ready(head(x))

    # f32-MXU head with identical weights for a tight numerical check.
    head_f32 = ArcMarginProduct(in_features, out_features, s=30.0, m=0.5,
                                easy_margin=False, key=k_w,
                                block_b=16, block_c=128,
                                matmul_dtype=jnp.float32)
    out_f32 = jax.block_until_ready(head_f32(x, label))
    cos_f32 = jax.block_until_ready(head_f32(x))

    ref, ref_cos = _reference(x, head.weight, label, head.s, head.cos_m,
                              head.sin_m, head.th, head.mm, head.easy_margin)

    assert out_bf16.shape == (B, out_features)
    assert cos_bf16.shape == (B, out_features)
    assert out_f32.shape == (B, out_features)

    # Tight check for the f32-operand path (matches PyTorch math).
    assert jnp.allclose(out_f32, ref, atol=5e-4, rtol=5e-4), "f32 margin mismatch"
    assert jnp.allclose(cos_f32, ref_cos, atol=1e-5, rtol=1e-5), "f32 cosine mismatch"

    # Looser check for the bf16-MXU default path (bf16 operand rounding).
    assert jnp.allclose(out_bf16, ref, atol=2e-1, rtol=5e-2), "bf16 margin mismatch"
    assert jnp.allclose(cos_bf16, ref_cos, atol=1e-2, rtol=1e-2), "bf16 cosine mismatch"

    # Slice-free path: out_features a multiple of 128 -> no column padding,
    # no post-kernel column slice, single grid point.
    B2, C2 = 8, 256
    x2 = jax.random.normal(k_x2, (B2, in_features), dtype=jnp.float32)
    label2 = jax.random.randint(k_lbl2, (B2,), 0, C2, dtype=jnp.int32)
    head2 = ArcMarginProduct(in_features, C2, key=k_w,
                             matmul_dtype=jnp.float32, block_b=8, block_c=256)
    out2 = jax.block_until_ready(head2(x2, label2))
    ref2, _ = _reference(x2, head2.weight, label2, head2.s, head2.cos_m,
                         head2.sin_m, head2.th, head2.mm, head2.easy_margin)
    assert out2.shape == (B2, C2)
    assert jnp.allclose(out2, ref2, atol=5e-4, rtol=5e-4), "pad-free path mismatch"

    print("KERNEL_OK")
</pallas_src>

<mosaic_0001>
module attributes {stable_mosaic.version = 11 : i64} {
  func.func @_arcmargin_kernel(%arg0: i32, %arg1: i32, %arg2: memref<16x1xi32, #tpu.memory_space<vmem>>, %arg3: memref<16x32xbf16, #tpu.memory_space<vmem>>, %arg4: memref<32x128xbf16, #tpu.memory_space<vmem>>, %arg5: memref<16x128xf32, #tpu.memory_space<vmem>>) attributes {dimension_semantics = [#tpu.dimension_semantics<parallel>, #tpu.dimension_semantics<parallel>], iteration_bounds = array<i64: 2, 2>, scalar_prefetch = 0 : i64, scratch_operands = 0 : i64, tpu.core_type = #tpu.core_type<tc>, window_params = [{transform_indices = @transform_0, window_bounds = array<i64: 16, 1>}, {transform_indices = @transform_1, window_bounds = array<i64: 16, 32>}, {transform_indices = @transform_2, window_bounds = array<i64: 32, 128>}, {transform_indices = @transform_3, window_bounds = array<i64: 16, 128>}]} {
    %c0 = arith.constant 0 : index
    %c0_0 = arith.constant 0 : index
    %0 = vector.load %arg3[%c0, %c0_0] : memref<16x32xbf16, #tpu.memory_space<vmem>>, vector<16x32xbf16>
    %c0_1 = arith.constant 0 : index
    %c0_2 = arith.constant 0 : index
    %1 = vector.load %arg4[%c0_1, %c0_2] : memref<32x128xbf16, #tpu.memory_space<vmem>>, vector<32x128xbf16>
    %cst = arith.constant dense<0.000000e+00> : vector<16x128xf32>
    %2 = tpu.matmul %0, %1, %cst {dimension_numbers = #tpu.dot_dimension_numbers<[1], [0], [0], [1], [0, 0, 1, 1], [], []>} : vector<16x32xbf16>, vector<32x128xbf16>, vector<16x128xf32> -> vector<16x128xf32>
    %3 = tpu.iota {dimensions = array<i32: 1>} : vector<16x128xi32>
    %c128_i32 = arith.constant 128 : i32
    %4 = arith.muli %arg0, %c128_i32 : i32
    %5 = vector.broadcast %4 : i32 to vector<16x128xi32>
    %6 = arith.addi %3, %5 : vector<16x128xi32>
    %c0_3 = arith.constant 0 : index
    %c0_4 = arith.constant 0 : index
    %7 = vector.load %arg2[%c0_3, %c0_4] : memref<16x1xi32, #tpu.memory_space<vmem>>, vector<16x1xi32>
    %8 = vector.broadcast %7 : vector<16x1xi32> to vector<16x128xi32>
    %9 = arith.cmpi eq, %6, %8 : vector<16x128xi32>
    %cst_5 = arith.constant 0.000000e+00 : f32
    %10 = vector.broadcast %cst_5 : f32 to vector<16x128xf32>
    %11 = arith.select %9, %2, %10 : vector<16x128xi1>, vector<16x128xf32>
    %cst_6 = arith.constant dense<0.000000e+00> : vector<16xf32>
    %12 = vector.multi_reduction <add>, %11, %cst_6 [1] : vector<16x128xf32> to vector<16xf32>
    %13 = vector.shape_cast %12 : vector<16xf32> to vector<16x1xf32>
    %14 = arith.mulf %13, %13 : vector<16x1xf32>
    %cst_7 = arith.constant 1.000000e+00 : f32
    %15 = vector.broadcast %cst_7 : f32 to vector<16x1xf32>
    %16 = arith.subf %15, %14 : vector<16x1xf32>
    %cst_8 = arith.constant 0.000000e+00 : f32
    %cst_9 = arith.constant 1.000000e+00 : f32
    %17 = vector.broadcast %cst_8 : f32 to vector<16x1xf32>
    %18 = arith.maximumf %17, %16 : vector<16x1xf32>
    %19 = vector.broadcast %cst_9 : f32 to vector<16x1xf32>
    %20 = arith.minimumf %19, %18 : vector<16x1xf32>
    %21 = math.sqrt %20 : vector<16x1xf32>
    %cst_10 = arith.constant 0.87758255 : f32
    %22 = vector.broadcast %cst_10 : f32 to vector<16x1xf32>
    %23 = arith.mulf %13, %22 : vector<16x1xf32>
    %cst_11 = arith.constant 0.47942555 : f32
    %24 = vector.broadcast %cst_11 : f32 to vector<16x1xf32>
    %25 = arith.mulf %21, %24 : vector<16x1xf32>
    %26 = arith.subf %23, %25 : vector<16x1xf32>
    %cst_12 = arith.constant -0.87758255 : f32
    %27 = vector.broadcast %cst_12 : f32 to vector<16x1xf32>
    %28 = arith.cmpf ogt, %13, %27 : vector<16x1xf32>
    %cst_13 = arith.constant 0.239712775 : f32
    %29 = vector.broadcast %cst_13 : f32 to vector<16x1xf32>
    %30 = arith.subf %13, %29 : vector<16x1xf32>
    %31 = arith.select %28, %26, %30 : vector<16x1xi1>, vector<16x1xf32>
    %32 = vector.shape_cast %31 : vector<16x1xf32> to vector<16x1xf32>
    %33 = vector.broadcast %32 : vector<16x1xf32> to vector<16x128xf32>
    %34 = arith.select %9, %33, %2 : vector<16x128xi1>, vector<16x128xf32>
    %cst_14 = arith.constant 3.000000e+01 : f32
    %35 = vector.broadcast %cst_14 : f32 to vector<16x128xf32>
    %36 = arith.mulf %34, %35 : vector<16x128xf32>
    %c0_15 = arith.constant 0 : index
    %c0_16 = arith.constant 0 : index
    %37 = vector.load %arg5[%c0_15, %c0_16] : memref<16x128xf32, #tpu.memory_space<vmem>>, vector<16x128xf32>
    tpu.vector_store %arg5[%c0_15, %c0_16], %36 {strides = array<i32>} : memref<16x128xf32, #tpu.memory_space<vmem>>, vector<16x128xf32>,
    return
  }
  func.func @transform_0(%arg0: i32, %arg1: i32) -> (i32, i32) {
    %c0_i32 = arith.constant 0 : i32
    %c0_i32_0 = arith.constant 0 : i32
    return %arg1, %c0_i32 : i32, i32
  }
  func.func @transform_1(%arg0: i32, %arg1: i32) -> (i32, i32) {
    %c0_i32 = arith.constant 0 : i32
    %c0_i32_0 = arith.constant 0 : i32
    return %arg1, %c0_i32 : i32, i32
  }
  func.func @transform_2(%arg0: i32, %arg1: i32) -> (i32, i32) {
    %c0_i32 = arith.constant 0 : i32
    %c0_i32_0 = arith.constant 0 : i32
    return %c0_i32, %arg0 : i32, i32
  }
  func.func @transform_3(%arg0: i32, %arg1: i32) -> (i32, i32) {
    %c0_i32 = arith.constant 0 : i32
    return %arg1, %arg0 : i32, i32
  }
}

</mosaic_0001>

<llo_original>
// kernel: tpu_custom_call.1
$region0: #{tpu_custom_call.1}
  #allocation0 [shape = 'u32[]', space=smem, size = 0x4, offset = 0x4, fixed_abs, tag = 'smem constant byte address 0x4 - core index']
  #allocation1 [shape = 'u32[144,128]{1,0:T(1,128)}', space=vmem, size = 0x12000, scoped, tag = 'internal scratch']
  %s0 = inlined_call_operand.vmem [shape: s32[32,1], index: 0, kind: input, shape index: {}]
  %s1 = inlined_call_operand.hbm [shape: bf16[32,32], index: 1, kind: input, shape index: {}]
  %s2 = inlined_call_operand.vmem [shape: bf16[32,256], index: 2, kind: input, shape index: {}]
  %s3 = inlined_call_operand.hbm [shape: f32[32,256], index: 3, kind: output, shape index: {}]
  %s4 = sld [smem:[#allocation0]]
  $region90: #{tpu_custom_call.1} parent=0
    _
  %s6 = ssub.s32 1, %s4
  %s7 = scalar_select 0, %s6, %s4
  $region1: #{tpu_custom_call.1} parent=0
    #allocation2 [shape = 'u8[8192]{0}', space=vmem, size = 0x2000, scoped, tag = 'input window, operand 1']
    #allocation3 [shape = 's32[2]{0}', space=sflag, size = 0x8, scoped, tag = 'scoped memory for tpu_custom_call.1']
    #allocation4 [shape = 's32[2]{0}', space=sflag, size = 0x8, scoped, tag = 'scoped memory for tpu_custom_call.1']
    #allocation5 [shape = 'u8[16384]{0}', space=vmem, size = 0x4000, scoped, tag = 'input window, operand 2']
    #allocation6 [shape = 'u8[16384]{0}', space=vmem, size = 0x4000, scoped, tag = 'output window, operand 0']
    %8 = vsyncpa [#allocation3], 0
    %s9 = scalar_lea.sflag [#allocation3], 1
    %10 = vsyncpa %s9, 0
    %11 = vsyncpa [#allocation4], 0
    %s12 = scalar_lea.sflag [#allocation4], 1
    %13 = vsyncpa %s12, 0
    loop: start=0, step=1, limit=6
    $region2: #{tpu_custom_call.1} parent=1 // loop_pre_header
      _
    $region3: #{tpu_custom_call.1} parent=1 // loop_header
      %s15 = sphi 0, %s19
      %p16 = scmp.ge.s32.totalorder %s15, 6
      %s22 = sphi 0, %s34
      %s23 = sphi 0, %s30
      %s24 = sphi 0, %s22
      %s25 = sphi 0, %s23
      %s26 = sphi 0, %s24
      %s27 = sphi 0, %s25
      %s37 = sphi 0, %s39
      %s40 = sphi 0, %s37
      %s41 = sphi 0, %s40
      %s57 = sphi 0, %s41
      %s63 = sphi 0, %s65
      %s66 = sphi 0, %s63
      %s67 = sphi 0, %s66
      %s83 = sphi 0, %s67
      %s89 = sphi 0, %s91
      %s92 = sphi 0, %s89
      %s93 = sphi 0, %s92
      %s109 = sphi 0, %s93
      %s117 = sphi 0, %s119
      %s120 = sphi 0, %s117
      %s121 = sphi 0, %s120
      %s137 = sphi 0, %s121
    $region4: #{tpu_custom_call.1} parent=1 // loop_header_branch
      %18 = sbr.rel (%p16) target = $region8
    $region5: #{tpu_custom_call.1} parent=1 // loop_body
      %s20 = ssub.s32 %s15, 1
      %s21 = ssub.s32 %s15, 2
      %s28 = sadd.s32 1, %s23
      %p29 = scmp.ge.s32.totalorder %s28, 2
      %s30 = scalar_select %p29, 0, %s28
      %s31 = sadd.s32 1, %s22
      %s32 = scalar_select %p29, %s31, %s22
      %p33 = scmp.ge.s32.totalorder %s32, 2
      %s34 = scalar_select %p33, 0, %s32
      %s35 = ssub.s32 %s23, %s30
      %p36 = scmp.eq.s32.totalorder %s35, 0
      %s38 = sadd.s32 %s37, 1
      %s39 = scalar_select %p36, %s37, %s38
      %p42 = pneg %p36
      %p43 = scmp.eq.s32.totalorder %s15, 3
      %p44 = por %p42, %p43
      %p45 = scmp.ne.s32.totalorder %s37, %s40
      %p46 = scmp.eq.s32.totalorder %s15, 0
      %p47 = por %p45, %p46
      %p48 = scmp.ne.s32.totalorder %s37, %s40
      %p49 = scmp.eq.s32.totalorder %s20, 3
      %p50 = por %p48, %p49
      %p51 = scmp.ne.s32.totalorder %s40, %s41
      %p52 = scmp.eq.s32.totalorder %s20, 0
      %p53 = por %p51, %p52
      %p54 = scmp.ne.s32.totalorder %s40, %s41
      %p55 = scmp.eq.s32.totalorder %s21, 3
      %p56 = por %p54, %p55
      %p58 = scmp.ne.s32.totalorder %s41, %s57
      %p59 = scmp.eq.s32.totalorder %s21, 0
      %p60 = por %p58, %p59
      %s61 = ssub.s32 %s23, %s30
      %p62 = scmp.eq.s32.totalorder %s61, 0
      %s64 = sadd.s32 %s63, 1
      %s65 = scalar_select %p62, %s63, %s64
      %p68 = pneg %p62
      %p69 = scmp.eq.s32.totalorder %s15, 3
      %p70 = por %p68, %p69
      %p71 = scmp.ne.s32.totalorder %s63, %s66
      %p72 = scmp.eq.s32.totalorder %s15, 0
      %p73 = por %p71, %p72
      %p74 = scmp.ne.s32.totalorder %s63, %s66
      %p75 = scmp.eq.s32.totalorder %s20, 3
      %p76 = por %p74, %p75
      %p77 = scmp.ne.s32.totalorder %s66, %s67
      %p78 = scmp.eq.s32.totalorder %s20, 0
      %p79 = por %p77, %p78
      %p80 = scmp.ne.s32.totalorder %s66, %s67
      %p81 = scmp.eq.s32.totalorder %s21, 3
      %p82 = por %p80, %p81
      %p84 = scmp.ne.s32.totalorder %s67, %s83
      %p85 = scmp.eq.s32.totalorder %s21, 0
      %p86 = por %p84, %p85
      %s87 = ssub.s32 %s22, %s34
      %p88 = scmp.eq.s32.totalorder %s87, 0
      %s90 = sadd.s32 %s89, 1
      %s91 = scalar_select %p88, %s89, %s90
      %p94 = pneg %p88
      %p95 = scmp.eq.s32.totalorder %s15, 3
      %p96 = por %p94, %p95
      %p97 = scmp.ne.s32.totalorder %s89, %s92
      %p98 = scmp.eq.s32.totalorder %s15, 0
      %p99 = por %p97, %p98
      %p100 = scmp.ne.s32.totalorder %s89, %s92
      %p101 = scmp.eq.s32.totalorder %s20, 3
      %p102 = por %p100, %p101
      %p103 = scmp.ne.s32.totalorder %s92, %s93
      %p104 = scmp.eq.s32.totalorder %s20, 0
      %p105 = por %p103, %p104
      %p106 = scmp.ne.s32.totalorder %s92, %s93
      %p107 = scmp.eq.s32.totalorder %s21, 3
      %p108 = por %p106, %p107
      %p110 = scmp.ne.s32.totalorder %s93, %s109
      %p111 = scmp.eq.s32.totalorder %s21, 0
      %p112 = por %p110, %p111
      %s113 = ssub.s32 %s23, %s30
      %s114 = ssub.s32 %s22, %s34
      %s115 = sor.u32 %s113, %s114
      %p116 = scmp.eq.s32.totalorder %s115, 0
      %s118 = sadd.s32 %s117, 1
      %s119 = scalar_select %p116, %s117, %s118
      %p122 = pneg %p116
      %p123 = scmp.eq.s32.totalorder %s15, 3
      %p124 = por %p122, %p123
      %p125 = scmp.ne.s32.totalorder %s117, %s120
      %p126 = scmp.eq.s32.totalorder %s15, 0
      %p127 = por %p125, %p126
      %p128 = scmp.ne.s32.totalorder %s117, %s120
      %p129 = scmp.eq.s32.totalorder %s20, 3
      %p130 = por %p128, %p129
      %p131 = scmp.ne.s32.totalorder %s120, %s121
      %p132 = scmp.eq.s32.totalorder %s20, 0
      %p133 = por %p131, %p132
      %p134 = scmp.ne.s32.totalorder %s120, %s121
      %p135 = scmp.eq.s32.totalorder %s21, 3
      %p136 = por %p134, %p135
      %p138 = scmp.ne.s32.totalorder %s121, %s137
      %p139 = scmp.eq.s32.totalorder %s21, 0
      %p140 = por %p138, %p139
      %p141 = scmp.le.s32.totalorder 1, %s15
      %p142 = scmp.lt.s32.totalorder %s15, 5
      %p143 = pnand %p141, %p142
      %p144 = pneg %p143
      // Predicated region
      $region9: #{tpu_custom_call.1} parent=5 // pred_check
        _
      $region10: #{tpu_custom_call.1} parent=5 // pred_check_branch
        %146 = sbr.rel (%p143) target = $region12
      $region11: #{tpu_custom_call.1} parent=5 // pred_region
        %s147 = ssub.s32 %s15, 1
      $region12: #{tpu_custom_call.1} parent=5 // pred_fallthru
        _
      %p148 = scmp.lt.s32.totalorder %s15, 4
      // Predicated region
      $region13: #{tpu_custom_call.1} parent=5 // pred_check
        %p149 = pneg %p148
      $region14: #{tpu_custom_call.1} parent=5 // pred_check_branch
        %151 = sbr.rel (%p149) target = $region16
      $region15: #{tpu_custom_call.1} parent=5 // pred_region
        // Predicated region
        $region17: #{tpu_custom_call.1} parent=15 // pred_check
          %p152 = pneg %p47
        $region18: #{tpu_custom_call.1} parent=15 // pred_check_branch
          %154 = sbr.rel (%p152) target = $region20
        $region19: #{tpu_custom_call.1} parent=15 // pred_region
          %s155 = smul.u32 2, %s23
          %p156 = scmp.lt.s32.totalorder %s155, 3
          %s157 = scalar_select %p156, %s155, 3
          %s158 = smul.addr %s157, 8
          %s159 = scalar_lea.vmem %s0, %s158
          %s160 = smul.u32 2, %s23
        $region20: #{tpu_custom_call.1} parent=15 // pred_fallthru
          _
        // Predicated region
        $region21: #{tpu_custom_call.1} parent=15 // pred_check
          %p161 = pneg %p73
        $region22: #{tpu_custom_call.1} parent=15 // pred_check_branch
          %163 = sbr.rel (%p161) target = $region24
        $region23: #{tpu_custom_call.1} parent=15 // pred_region
          %s164 = sand.u32 %s63, 1
          %s165 = scalar_lea.sflag [#allocation3], %s164
          %s166 = sand.u32 %s63, 1
          %s167 = smul.addr %s166, 8
          %s168 = scalar_lea.vmem [#allocation2], %s167
          %s169 = smul.u32 2, %s23
          %s171 = ssub.s32 128, 128
          %172 = vsyncadd %s165, %s171
          %s173 = smul.addr %s169, 64
          %s174 = scalar_lea.hbm %s1, %s173
          %s175 = sshll.u32 %s168, 4
          %s176 = int_to_ptr.vmem [resolvable:$true] %s175
          %181 = dma.hbm_to_vmem [thread:$0]  %s174, 128, %s176, %s165, 64, 64, 4
        $region24: #{tpu_custom_call.1} parent=15 // pred_fallthru
          _
        // Predicated region
        $region25: #{tpu_custom_call.1} parent=15 // pred_check
          %p182 = pneg %p99
        $region26: #{tpu_custom_call.1} parent=15 // pred_check_branch
          %184 = sbr.rel (%p182) target = $region28
        $region27: #{tpu_custom_call.1} parent=15 // pred_region
          %s185 = sand.u32 %s89, 1
          %s186 = sand.u32 %s89, 1
          %s187 = smul.addr %s186, 16
          %s188 = scalar_lea.vmem [#allocation5], %s187
          %s189 = smul.addr %s22, 4
          %s190 = scalar_lea.vmem %s2, %s189
          // Predicated region
          $region29: #{tpu_custom_call.1} parent=27 // pred_check
            _
          $region30: #{tpu_custom_call.1} parent=27 // pred_check_branch
            %192 = sbr.rel (0) target = $region32
          $region31: #{tpu_custom_call.1} parent=27 // pred_region
            // Predicated region
            $region33: #{tpu_custom_call.1} parent=31 // pred_check
              _
            $region34: #{tpu_custom_call.1} parent=31 // pred_check_branch
              %194 = sbr.rel target = $region36
            $region35: #{tpu_custom_call.1} parent=31 // pred_region
              // Predicated region
              $region48: #{tpu_custom_call.1} parent=35 // pred_check
                _
              $region49: #{tpu_custom_call.1} parent=35 // pred_check_branch
                %215 = sbr.rel (0) target = $region51
              $region50: #{tpu_custom_call.1} parent=35 // pred_region
                loop: start=0, step=1, limit=1
                $region52: #{tpu_custom_call.1} parent=50 // loop_pre_header
                  _
                $region53: #{tpu_custom_call.1} parent=50 // loop_header
                  %s217 = sphi 0, %s221
                  %p218 = scmp.ge.s32.totalorder %s217, 1
                  %s222 = sphi %s190, %s190
                  %s223 = sphi %s188, %s188
                $region54: #{tpu_custom_call.1} parent=50 // loop_header_branch
                  %220 = sbr.rel (%p218) target = $region58
                $region55: #{tpu_custom_call.1} parent=50 // loop_body
                  _
                $region56: #{tpu_custom_call.1} parent=50 // loop_footer
                  %s221 = sadd.s32 1, %s217
                $region57: #{tpu_custom_call.1} parent=50 // loop_footer_branch
                  %216 = sbr.rel target = $region53
                $region58: #{tpu_custom_call.1} parent=50 // loop_exit
                  _
                loop: start=0, step=1, limit=1
                $region59: #{tpu_custom_call.1} parent=50 // loop_pre_header
                  _
                $region60: #{tpu_custom_call.1} parent=50 // loop_header
                  %s226 = sphi 0, %s230
                  %p227 = scmp.ge.s32.totalorder %s226, 1
                  %s231 = sphi %s190, %s190
                  %s232 = sphi %s188, %s188
                $region61: #{tpu_custom_call.1} parent=50 // loop_header_branch
                  %229 = sbr.rel (%p227) target = $region65
                $region62: #{tpu_custom_call.1} parent=50 // loop_body
                  %v233 = vld [vmem:[%s231] sm:$0xf]
                  %234 = vst [vmem:[%s232] sm:$0xf] %v233
                  %v235 = vld [vmem:[%s231 + $0x8] sm:$0xf]
                  %236 = vst [vmem:[%s232 + $0x4] sm:$0xf] %v235
                  %v237 = vld [vmem:[%s231 + $0x10] sm:$0xf]
                  %238 = vst [vmem:[%s232 + $0x8] sm:$0xf] %v237
                  %v239 = vld [vmem:[%s231 + $0x18] sm:$0xf]
                  %240 = vst [vmem:[%s232 + $0xc] sm:$0xf] %v239
                $region63: #{tpu_custom_call.1} parent=50 // loop_footer
                  %s230 = sadd.s32 1, %s226
                $region64: #{tpu_custom_call.1} parent=50 // loop_footer_branch
                  %225 = sbr.rel target = $region60
                $region65: #{tpu_custom_call.1} parent=50 // loop_exit
                  _
              $region51: #{tpu_custom_call.1} parent=35 // pred_fallthru
                _
            $region36: #{tpu_custom_call.1} parent=31 // pred_fallthru
              _
            // Predicated region
            $region37: #{tpu_custom_call.1} parent=31 // pred_check
              _
            $region38: #{tpu_custom_call.1} parent=31 // pred_check_branch
              %196 = sbr.rel (0) target = $region40
            $region39: #{tpu_custom_call.1} parent=31 // pred_region
              loop: start=0, step=1, limit=1
              $region41: #{tpu_custom_call.1} parent=39 // loop_pre_header
                _
              $region42: #{tpu_custom_call.1} parent=39 // loop_header
                %s199 = sphi 0, %s203
                %p200 = scmp.ge.s32.totalorder %s199, 1
                %s204 = sphi %s190, %s190
                %s205 = sphi %s188, %s188
              $region43: #{tpu_custom_call.1} parent=39 // loop_header_branch
                %202 = sbr.rel (%p200) target = $region47
              $region44: #{tpu_custom_call.1} parent=39 // loop_body
                %v206 = vld [vmem:[%s204] sm:$0xf]
                %207 = vst [vmem:[%s205] sm:$0xf] %v206
                %v208 = vld [vmem:[%s204 + $0x8] sm:$0xf]
                %209 = vst [vmem:[%s205 + $0x4] sm:$0xf] %v208
                %v210 = vld [vmem:[%s204 + $0x10] sm:$0xf]
                %211 = vst [vmem:[%s205 + $0x8] sm:$0xf] %v210
                %v212 = vld [vmem:[%s204 + $0x18] sm:$0xf]
                %213 = vst [vmem:[%s205 + $0xc] sm:$0xf] %v212
              $region45: #{tpu_custom_call.1} parent=39 // loop_footer
                %s203 = sadd.s32 1, %s199
              $region46: #{tpu_custom_call.1} parent=39 // loop_footer_branch
                %198 = sbr.rel target = $region42
              $region47: #{tpu_custom_call.1} parent=39 // loop_exit
                _
            $region40: #{tpu_custom_call.1} parent=31 // pred_fallthru
              _
          $region32: #{tpu_custom_call.1} parent=27 // pred_fallthru
            _
          %241 = vnop
        $region28: #{tpu_custom_call.1} parent=15 // pred_fallthru
          _
      $region16: #{tpu_custom_call.1} parent=5 // pred_fallthru
        _
      %p242 = scmp.le.s32.totalorder 1, %s15
      %p243 = scmp.lt.s32.totalorder %s15, 5
      %p244 = pnand %p242, %p243
      %p245 = pneg %p244
      // Predicated region
      $region66: #{tpu_custom_call.1} parent=5 // pred_check
        _
      $region67: #{tpu_custom_call.1} parent=5 // pred_check_branch
        %247 = sbr.rel (%p244) target = $region69
      $region68: #{tpu_custom_call.1} parent=5 // pred_region
        %s248 = ssub.s32 %s15, 1
        %s249 = sand.u32 %s66, 1
        %s250 = scalar_lea.sflag [#allocation3], %s249
        %s251 = sand.u32 %s66, 1
        %s252 = smul.addr %s251, 8
        %s253 = scalar_lea.vmem [#allocation2], %s252
        // Predicated region
        $region70: #{tpu_custom_call.1} parent=68 // pred_check
          %p254 = pneg %p79
        $region71: #{tpu_custom_call.1} parent=68 // pred_check_branch
          %256 = sbr.rel (%p254) target = $region73
        $region72: #{tpu_custom_call.1} parent=68 // pred_region
          %257 = dma.done %s250, 128
        $region73: #{tpu_custom_call.1} parent=68 // pred_fallthru
          _
        %s258 = sand.u32 %s92, 1
        %s259 = sand.u32 %s92, 1
        %s260 = smul.addr %s259, 16
        %s261 = scalar_lea.vmem [#allocation5], %s260
        // Predicated region
        $region74: #{tpu_custom_call.1} parent=68 // pred_check
          %p262 = pneg %p105
        $region75: #{tpu_custom_call.1} parent=68 // pred_check_branch
          %264 = sbr.rel (%p262) target = $region77
        $region76: #{tpu_custom_call.1} parent=68 // pred_region
          _
        $region77: #{tpu_custom_call.1} parent=68 // pred_fallthru
          _
        %s265 = smul.u32 2, %s25
        %p266 = scmp.lt.s32.totalorder %s265, 3
        %s267 = scalar_select %p266, %s265, 3
        %s268 = smul.addr %s267, 8
        %s269 = scalar_lea.vmem %s0, %s268
        %p270 = pneg %p53
        %p271 = pneg %p50
        %s272 = sand.u32 %s66, 1
        %s273 = scalar_lea.sflag [#allocation3], %s272
        %s274 = sand.u32 %s66, 1
        %s275 = smul.addr %s274, 8
        %s276 = scalar_lea.vmem [#allocation2], %s275
        %p277 = pneg %p79
        %p278 = pneg %p76
        %s279 = sand.u32 %s92, 1
        %s280 = sand.u32 %s92, 1
        %s281 = smul.addr %s280, 16
        %s282 = scalar_lea.vmem [#allocation5], %s281
        %p283 = pneg %p105
        %p284 = pneg %p102
        %p285 = pneg %p133
        %p286 = pneg %p130
        %s287 = sand.u32 %s120, 1
        %s288 = scalar_lea.sflag [#allocation4], %s287
        %s289 = sand.u32 %s120, 1
        %s290 = smul.addr %s289, 16
        %s291 = scalar_lea.vmem [#allocation6], %s290
        %s292 = smul.u32 2, %s25
        %p293 = scmp.lt.s32.totalorder %s292, 3
        %s294 = scalar_select %p293, %s292, 3
        %s295 = smul.addr %s294, 8
        %s296 = scalar_lea.vmem %s0, %s295
        %s297 = smul.u32 2, %s25
        %s298 = smul.u32 2, %s25
        %s299 = smul.u32 2, %s25
        %v301 = vld [vmem:[%s253] sm:$0xf]
        %v302 = vld [vmem:[%s253 + $0x4] sm:$0xf]
        %v303 = vld [vmem:[%s261] sm:$0xf]
        %v304 = vld [vmem:[%s261 + $0x4] sm:$0xf]
        %v305 = vld [vmem:[%s261 + $0x8] sm:$0xf]
        %v306 = vld [vmem:[%s261 + $0xc] sm:$0xf]
        %v309 = vunpack.c.l.b16 %v301
        %v310 = vunpack.c.l.b16 %v302
        %v311 = vpack.c.b16 %v310, %v309
        %v316 = vunpack.c.l.b16 %v303
        %v317 = vunpack.c.l.b16 %v304
        %v318 = vunpack.c.l.b16 %v305
        %v319 = vunpack.c.l.b16 %v306
        %v320 = vpack.c.b16 %v317, %v316
        %v321 = vpack.c.b16 %v319, %v318
        %vm324 = vcmask 261120
        %v326 = vsel %vm324, %v311, 0
        %328 = vmatprep.subr.bf16.mxu0 0
        %329 = vmatpush1.bf16.msra.mxu0 %v320
        %330 = vmatprep.subr.bf16.mxu0 0
        %331 = vmatpush1.bf16.msra.mxu0 %v321
        %332 = vmatprep.subr.bf16.mxu0 0
        %333 = vmatpush1.bf16.msra.mxu0 0
        %334 = vmatprep.subr.bf16.mxu0 0
        %335 = vmatpush1.bf16.msra.mxu0 0
        %336 = vmatprep.subr.bf16.mxu0 0
        %337 = vmatpush1.bf16.msra.mxu0 0
        %338 = vmatprep.subr.bf16.mxu0 0
        %339 = vmatpush1.bf16.msra.mxu0 0
        %340 = vmatprep.subr.bf16.mxu0 0
        %341 = vmatpush1.bf16.msra.mxu0 0
        %342 = vmatprep.subr.bf16.mxu0 0
        %343 = vmatpush1.bf16.msra.mxu0 0
        %344 = vmatprep.subr.bf16.mxu0 0
        %345 = vmatpush1.bf16.msra.mxu0 0
        %346 = vmatprep.subr.bf16.mxu0 0
        %347 = vmatpush1.bf16.msra.mxu0 0
        %348 = vmatprep.subr.bf16.mxu0 0
        %349 = vmatpush1.bf16.msra.mxu0 0
        %350 = vmatprep.subr.bf16.mxu0 0
        %351 = vmatpush1.bf16.msra.mxu0 0
        %352 = vmatprep.subr.bf16.mxu0 0
        %353 = vmatpush1.bf16.msra.mxu0 0
        %354 = vmatprep.subr.bf16.mxu0 0
        %355 = vmatpush1.bf16.msra.mxu0 0
        %356 = vmatprep.subr.bf16.mxu0 0
        %357 = vmatpush1.bf16.msra.mxu0 0
        %358 = vmatprep.subr.bf16.mxu0 0
        %359 = vmatpush1.bf16.msra.mxu0 0
        %360 = vmatprep.mubr.bf16.mxu0 0
        %361 = vmatmul.mubr.bf16.gmra.mrb[0].mxu0 %v326
        %v362 = vpop.f32.mrb[0].mxu0
        %v363 = vadd.f32 0.0, %v362
        %v364 = vpop.f32.mrb[0].mxu0
        %v365 = vpop.f32.mrb[0].mxu0
        %v366 = vadd.f32 0.0, %v365
        %v367 = vpop.f32.mrb[0].mxu0
        %368 = vdwg.mxu0
        %v369 = vlaneseq
        %v370 = vand.u32 %v369, 127
        %s371 = smul.u32 %s24, 128
        %v372 = vstv %s371
        %v373 = vadd.s32 %v370, %v372
        %v374 = vld [vmem:[%s296] sm:$0xff]
        %v375 = vld [vmem:[%s296 + $0x8] sm:$0xff]
        %376 = vset.pattern.permute.xlu0 0
        %377 = vperm.xlu0 %376, %v374
        %v378 = vpop.permute.xlu0 %377
        %379 = vset.pattern.permute.xlu0 0
        %380 = vperm.xlu0 %379, %v375
        %v381 = vpop.permute.xlu0 %380
        %vm382 = vcmp.eq.s32.totalorder %v373, %v378
        %vm383 = vcmp.eq.s32.totalorder %v373, %v381
        %v384 = vsel %vm382, %v363, 0.0
        %v385 = vsel %vm383, %v366, 0.0
        %386 = vadd.xlane.f32.xlu0 %v384
        %v387 = vpop.xlane.xlu0 %386
        %388 = vadd.xlane.f32.xlu0 %v385
        %v389 = vpop.xlane.xlu0 %388
        %v390 = vmul.f32 %v387, %v387
        %v391 = vmul.f32 %v389, %v389
        %v392 = vsub.f32 1.0, %v390
        %v393 = vsub.f32 1.0, %v391
        %v394 = vmax.f32 %v392, 0.0
        %v395 = vmax.f32 %v393, 0.0
        %v396 = vmin.f32 %v394, 1.0
        %v397 = vmin.f32 %v395, 1.0
        %v398 = vrsqrt.pop %v396
        %v399 = vmul.f32 %v396, %v398
        %vm400 = vcmp.eq.f32.partialorder %v396, inf
        %v401 = vsel %vm400, %v396, %v399
        %vm402 = vcmp.eq.f32.partialorder %v396, 0.0
        %v403 = vand.u32 %v396, 2147483648
        %v404 = vsel %vm402, %v403, %v401
        %v405 = vrsqrt.pop %v397
        %v406 = vmul.f32 %v397, %v405
        %vm407 = vcmp.eq.f32.partialorder %v397, inf
        %v408 = vsel %vm407, %v397, %v406
        %vm409 = vcmp.eq.f32.partialorder %v397, 0.0
        %v410 = vand.u32 %v397, 2147483648
        %v411 = vsel %vm409, %v410, %v408
        %v412 = vmul.f32 %v387, 0.87758255
        %v413 = vmul.f32 %v389, 0.87758255
        %v414 = vmul.f32 %v404, 0.47942555
        %v415 = vmul.f32 %v411, 0.47942555
        %v416 = vsub.f32 %v412, %v414
        %v417 = vsub.f32 %v413, %v415
        %vm418 = vcmp.gt.f32.partialorder %v387, -0.87758255
        %vm419 = vcmp.gt.f32.partialorder %v389, -0.87758255
        %v420 = vsub.f32 %v387, 0.23971277
        %v421 = vsub.f32 %v389, 0.23971277
        %v422 = vsel %vm418, %v416, %v420
        %v423 = vsel %vm419, %v417, %v421
        %v424 = vsel %vm382, %v422, %v363
        %v425 = vsel %vm383, %v423, %v366
        %v426 = vmul.f32 %v424, 30.0
        %v427 = vmul.f32 %v425, 30.0
        %428 = vst [vmem:[%s291] sm:$0xff] %v426
        %429 = vst [vmem:[%s291 + $0x8] sm:$0xff] %v427
        %s430 = sand.u32 %s120, 1
        %s431 = scalar_lea.sflag [#allocation4], %s430
        %s432 = sand.u32 %s120, 1
        %s433 = smul.addr %s432, 16
        %s434 = scalar_lea.vmem [#allocation6], %s433
        // Predicated region
        $region78: #{tpu_custom_call.1} parent=68 // pred_check
          %p435 = pneg %p130
        $region79: #{tpu_custom_call.1} parent=68 // pred_check_branch
          %437 = sbr.rel (%p435) target = $region81
        $region80: #{tpu_custom_call.1} parent=68 // pred_region
          %s438 = smul.u32 2, %s25
          %s440 = ssub.s32 256, 256
          %441 = vsyncadd %s431, %s440
          %s442 = smul.addr %s438, 2
          %s443 = sadd.s32 %s24, %s442
          %s444 = smul.addr %s443, 128
          %s445 = scalar_lea.hbm %s3, %s444
          %s446 = sshll.u32 %s434, 4
          %s447 = int_to_ptr.vmem [resolvable:$true] %s446
          %452 = dma.vmem_to_hbm [thread:$0]  %s447, 256, %s445, %s431, 128, 256, 8
        $region81: #{tpu_custom_call.1} parent=68 // pred_fallthru
          _
      $region69: #{tpu_custom_call.1} parent=5 // pred_fallthru
        _
      %p453 = scmp.le.s32.totalorder 2, %s15
      // Predicated region
      $region82: #{tpu_custom_call.1} parent=5 // pred_check
        %p454 = pneg %p453
      $region83: #{tpu_custom_call.1} parent=5 // pred_check_branch
        %456 = sbr.rel (%p454) target = $region85
      $region84: #{tpu_custom_call.1} parent=5 // pred_region
        %s457 = ssub.s32 %s15, 2
        // Predicated region
        $region86: #{tpu_custom_call.1} parent=84 // pred_check
          %p458 = pneg %p136
        $region87: #{tpu_custom_call.1} parent=84 // pred_check_branch
          %460 = sbr.rel (%p458) target = $region89
        $region88: #{tpu_custom_call.1} parent=84 // pred_region
          %s461 = sand.u32 %s121, 1
          %s462 = scalar_lea.sflag [#allocation4], %s461
          %s463 = sand.u32 %s121, 1
          %s464 = smul.addr %s463, 16
          %s465 = scalar_lea.vmem [#allocation6], %s464
          %466 = dma.done %s462, 256
        $region89: #{tpu_custom_call.1} parent=84 // pred_fallthru
          _
      $region85: #{tpu_custom_call.1} parent=5 // pred_fallthru
        _
    $region6: #{tpu_custom_call.1} parent=1 // loop_footer
      %s19 = sadd.s32 1, %s15
    $region7: #{tpu_custom_call.1} parent=1 // loop_footer_branch
      %14 = sbr.rel target = $region3
    $region8: #{tpu_custom_call.1} parent=1 // loop_exit
      _
    %467 = vsyncpa [#allocation3], 1
    %s468 = scalar_lea.sflag [#allocation3], 1
    %469 = vsyncpa %s468, 1
    %470 = vsyncpa [#allocation4], 1
    %s471 = scalar_lea.sflag [#allocation4], 1
    %472 = vsyncpa %s471, 1

</llo_original>
